<compile_context>
chip_gen: v5e
topology: v5e:2x2
jax: 0.10.0
libtpu: 0.0.40
codegen_flags: <defaults>
</compile_context>

<pallas_src>
import jax
import jax.numpy as jnp
from jax.experimental import pallas as pl
from jax.experimental.pallas import tpu as pltpu

_LANE = 128
_TARGET_BLOCK_BYTES = 4 << 20   # ~4 MiB tiles: amortizes ~0.35 us/step overhead,
                                # ~85%+ of HBM roofline for a mem-bound copy.
_VMEM_LIMIT_BYTES = 32 << 20    # 2x-in + 2x-out double buffers (16 MiB) + headroom;
                                # safe on v5e/v6e (128 MiB) and v7x (64 MiB) VMEM.


def _sublane_multiple(dtype) -> int:
    """Minimum row-tile multiple so packed dtypes fill whole vregs."""
    itemsize = jnp.dtype(dtype).itemsize
    if itemsize >= 4:
        return 8
    if itemsize == 2:
        return 16
    return 32


def _copy_kernel(x_ref, o_ref):
    # Whole-tile pass-through; vld/vst work is fully hidden under the HBM DMAs.
    o_ref[...] = x_ref[...]


def _pallas_identity_copy(x):
    """Lane-dense, double-buffered Pallas identity copy (materializes output)."""
    orig_shape = x.shape
    total = int(x.size)
    itemsize = jnp.dtype(x.dtype).itemsize
    sub = _sublane_multiple(x.dtype)

    if total % _LANE == 0:
        # Lane-dense layout: widest last dim (multiple of 128, up to 4096) that
        # divides the element count -> full-lane, unmasked stores.
        width = _LANE
        while width * 2 <= min(total, 4096) and total % (width * 2) == 0:
            width *= 2
    else:
        # Awkward sizes: keep the original last dim (full-extent block along the
        # lane axis is always legal) and row-tile the rest.
        width = orig_shape[-1]
    rows = total // width

    # ~4 MiB per block, rounded to a dtype-aware sublane multiple.
    target_rows = max(sub, _TARGET_BLOCK_BYTES // max(1, width * itemsize))
    if rows <= target_rows:
        tile_rows = rows                       # block == full dim: always legal
    else:
        tile_rows = max(sub, (target_rows // sub) * sub)

    x2d = x.reshape(rows, width)
    grid = (pl.cdiv(rows, tile_rows),)

    out = pl.pallas_call(
        _copy_kernel,
        out_shape=jax.ShapeDtypeStruct((rows, width), x.dtype),
        grid_spec=pltpu.PrefetchScalarGridSpec(
            num_scalar_prefetch=0,
            grid=grid,
            in_specs=[pl.BlockSpec((tile_rows, width), lambda i: (i, 0))],
            out_specs=pl.BlockSpec((tile_rows, width), lambda i: (i, 0)),
        ),
        compiler_params=pltpu.CompilerParams(
            # "parallel": lets v7x megacore shard grid steps across its 2 TCs;
            # harmless on single-TC v5e/v6e.
            dimension_semantics=("parallel",),
            vmem_limit_bytes=_VMEM_LIMIT_BYTES,
        ),
        # Advisory: trivial mem-bound op (0 flops, read + write of the tensor).
        cost_estimate=pl.CostEstimate(
            flops=0, transcendentals=0, bytes_accessed=2 * total * itemsize
        ),
    )(x2d)

    return out.reshape(orig_shape)


def model_template_forward(x, materialize_copy=False):
    """Pallas equivalent of ModelTemplate.forward (empty forward).

    Default path: the module does nothing, so return the input as-is — no
    pallas_call, no reshape, zero HBM traffic.  Set `materialize_copy=True`
    only when a distinct output buffer is explicitly required; that path runs
    a lane-dense Pallas identity-copy kernel.
    """
    if (not materialize_copy) or x.ndim == 0 or x.size == 0:
        return x
    return _pallas_identity_copy(x)


if __name__ == "__main__":
    key = jax.random.PRNGKey(0)
    # Small NCHW input consistent with a generic conv-style module template.
    x = jax.random.normal(key, (2, 4, 16, 16), dtype=jnp.float32)

    # Zero-cost default path: empty forward == identity, no kernel launch.
    y_fast = model_template_forward(x)

    # Exercise the Pallas identity-copy kernel once to verify compile/run.
    y_copy = model_template_forward(x, materialize_copy=True)
    y_copy = jax.block_until_ready(y_copy)

    assert y_fast.shape == x.shape and y_fast.dtype == x.dtype
    assert y_copy.shape == x.shape and y_copy.dtype == x.dtype
    assert bool(jnp.allclose(y_fast, x))
    assert bool(jnp.allclose(y_copy, x))

    print("KERNEL_OK")
</pallas_src>

<mosaic_0001>
module attributes {stable_mosaic.version = 11 : i64} {
  func.func @_copy_kernel(%arg0: i32, %arg1: memref<1x2048xf32, #tpu.memory_space<vmem>>, %arg2: memref<1x2048xf32, #tpu.memory_space<vmem>>) attributes {dimension_semantics = [#tpu.dimension_semantics<parallel>], iteration_bounds = array<i64: 1>, scalar_prefetch = 0 : i64, scratch_operands = 0 : i64, tpu.core_type = #tpu.core_type<tc>, window_params = [{transform_indices = @transform_0, window_bounds = array<i64: 1, 2048>}, {transform_indices = @transform_1, window_bounds = array<i64: 1, 2048>}]} {
    %c0 = arith.constant 0 : index
    %c0_0 = arith.constant 0 : index
    %0 = vector.load %arg1[%c0, %c0_0] : memref<1x2048xf32, #tpu.memory_space<vmem>>, vector<1x2048xf32>
    %c0_1 = arith.constant 0 : index
    %c0_2 = arith.constant 0 : index
    %1 = vector.load %arg2[%c0_1, %c0_2] : memref<1x2048xf32, #tpu.memory_space<vmem>>, vector<1x2048xf32>
    tpu.vector_store %arg2[%c0_1, %c0_2], %0 {strides = array<i32>} : memref<1x2048xf32, #tpu.memory_space<vmem>>, vector<1x2048xf32>,
    return
  }
  func.func @transform_0(%arg0: i32) -> (i32, i32) {
    %c0_i32 = arith.constant 0 : i32
    %c0_i32_0 = arith.constant 0 : i32
    return %arg0, %c0_i32 : i32, i32
  }
  func.func @transform_1(%arg0: i32) -> (i32, i32) {
    %c0_i32 = arith.constant 0 : i32
    %c0_i32_0 = arith.constant 0 : i32
    return %arg0, %c0_i32 : i32, i32
  }
}

</mosaic_0001>

<llo_original>
// kernel: tpu_custom_call.1
$region0: #{tpu_custom_call.1}
  #allocation0 [shape = 'u32[]', space=smem, size = 0x4, offset = 0x4, fixed_abs, tag = 'smem constant byte address 0x4 - core index']
  #allocation1 [shape = 'u32[72,128]{1,0:T(1,128)}', space=vmem, size = 0x9000, scoped, tag = 'internal scratch']
  %s0 = inlined_call_operand.hbm [shape: f32[1,2048], index: 0, kind: input, shape index: {}]
  %s1 = inlined_call_operand.hbm [shape: f32[1,2048], index: 1, kind: output, shape index: {}]
  %s2 = sld [smem:[#allocation0]]
  $region18: #{tpu_custom_call.1} parent=0
    _
  %s4 = ssub.s32 1, %s2
  %s5 = scalar_select 0, %s4, %s2
  $region1: #{tpu_custom_call.1} parent=0
    #allocation2 [shape = 'u8[8192]{0}', space=vmem, size = 0x2000, scoped, tag = 'input window, operand 0, single buffered']
    #allocation3 [shape = 's32[1]{0}', space=sflag, size = 0x4, scoped, tag = 'scoped memory for tpu_custom_call.1']
    #allocation4 [shape = 's32[1]{0}', space=sflag, size = 0x4, scoped, tag = 'scoped memory for tpu_custom_call.1']
    #allocation5 [shape = 'u8[8192]{0}', space=vmem, size = 0x2000, scoped, tag = 'output window, operand 0, single buffered']
    %6 = vsyncpa [#allocation3], 0
    %7 = vsyncpa [#allocation4], 0
    // Predicated region
    $region2: #{tpu_custom_call.1} parent=1 // pred_check
      _
    $region3: #{tpu_custom_call.1} parent=1 // pred_check_branch
      %9 = sbr.rel (0) target = $region5
    $region4: #{tpu_custom_call.1} parent=1 // pred_region
      %11 = vsyncadd [#allocation3], 0
      %s13 = sshll.u32 %s0, 4
      %s14 = int_to_ptr.hbm [resolvable:$true] %s13
      %s15 = sshll.u32 [#allocation2], 4
      %s16 = int_to_ptr.vmem [resolvable:$true] %s15
      %18 = dma.hbm_to_vmem [thread:$0]  %s14, 256, %s16, [#allocation3]
    $region5: #{tpu_custom_call.1} parent=1 // pred_fallthru
      _
    // Predicated region
    $region6: #{tpu_custom_call.1} parent=1 // pred_check
      _
    $region7: #{tpu_custom_call.1} parent=1 // pred_check_branch
      %20 = sbr.rel (0) target = $region9
    $region8: #{tpu_custom_call.1} parent=1 // pred_region
      %22 = dma.done [#allocation3], 256
    $region9: #{tpu_custom_call.1} parent=1 // pred_fallthru
      _
    %v23 = vld [vmem:[#allocation2] sm:$0xff]
    %v24 = vld [vmem:[#allocation2 + $0x8] sm:$0xff]
    %25 = vst [vmem:[#allocation5] sm:$0xff] %v23
    %26 = vst [vmem:[#allocation5 + $0x8] sm:$0xff] %v24
    // Predicated region
    $region10: #{tpu_custom_call.1} parent=1 // pred_check
      _
    $region11: #{tpu_custom_call.1} parent=1 // pred_check_branch
      %28 = sbr.rel (0) target = $region13
    $region12: #{tpu_custom_call.1} parent=1 // pred_region
      %30 = vsyncadd [#allocation4], 0
      %s32 = sshll.u32 [#allocation5], 4
      %s33 = int_to_ptr.vmem [resolvable:$true] %s32
      %s34 = sshll.u32 %s1, 4
      %s35 = int_to_ptr.hbm [resolvable:$true] %s34
      %37 = dma.vmem_to_hbm [thread:$0]  %s33, 256, %s35, [#allocation4]
    $region13: #{tpu_custom_call.1} parent=1 // pred_fallthru
      _
    // Predicated region
    $region14: #{tpu_custom_call.1} parent=1 // pred_check
      _
    $region15: #{tpu_custom_call.1} parent=1 // pred_check_branch
      %39 = sbr.rel (0) target = $region17
    $region16: #{tpu_custom_call.1} parent=1 // pred_region
      %41 = dma.done [#allocation4], 256
    $region17: #{tpu_custom_call.1} parent=1 // pred_fallthru
      _
    %42 = vsyncpa [#allocation3], 1
    %43 = vsyncpa [#allocation4], 1

</llo_original>
